<compile_context>
chip_gen: v7x
topology: tpu7x:2x2x1
jax: 0.10.0
libtpu: 0.0.40
codegen_flags: <defaults>
</compile_context>

<pallas_src>
import jax
import jax.numpy as jnp
from jax import lax
from jax.experimental import pallas as pl
from jax.experimental.pallas import tpu as pltpu


def _discriminator2_kernel(p1_ref, p2_ref, f1_ref, f2_ref, out_ref):
    eps2 = jnp.float32(1e-24)  # (F.normalize eps = 1e-12) squared

    # Scale features by (dropout-applied) parameters; accumulate in f32.
    p1 = p1_ref[...].astype(jnp.float32)            # (1, D)
    p2 = p2_ref[...].astype(jnp.float32)            # (1, D)
    f1 = f1_ref[...].astype(jnp.float32) * p1       # (TILE_N, D)
    f2 = f2_ref[...].astype(jnp.float32) * p2       # (TILE_N, D)

    # Three row-wise reductions — no normalized (N, D) temporaries.
    s11 = jnp.sum(f1 * f1, axis=1, keepdims=True)   # (TILE_N, 1)
    s22 = jnp.sum(f2 * f2, axis=1, keepdims=True)   # (TILE_N, 1)
    s12 = jnp.sum(f1 * f2, axis=1, keepdims=True)   # (TILE_N, 1)

    # diag = s12 / (max(||f1||,eps) * max(||f2||,eps)); rsqrt lands on the EUP.
    diag = s12 * lax.rsqrt(jnp.maximum(s11, eps2)) * lax.rsqrt(jnp.maximum(s22, eps2))

    out_ref[...] = jax.nn.sigmoid(diag).astype(out_ref.dtype)


def discriminator_2_forward(p1, p2, feat1, feat2, *,
                            dropout=0.5, training=False, key=None):
    """JAX/Pallas equivalent of Discriminator_2.forward.

    Dropout on the (D,)-sized parameter vectors is parameter "glue"
    (elementwise mask + 1/(1-p) rescale, deterministic via `key`); the hot
    path (scale, three row reductions, rsqrt, sigmoid) runs in the kernel.
    """
    N, D = feat1.shape
    assert feat2.shape == (N, D) and p1.shape == (D,) and p2.shape == (D,)

    if training and dropout > 0.0:
        assert key is not None
        k1, k2 = jax.random.split(key)
        keep = 1.0 - dropout
        m1 = jax.random.bernoulli(k1, keep, (D,))
        m2 = jax.random.bernoulli(k2, keep, (D,))
        p1d = jnp.where(m1, p1 / keep, 0.0).astype(feat1.dtype)
        p2d = jnp.where(m2, p2 / keep, 0.0).astype(feat2.dtype)
    else:
        p1d, p2d = p1.astype(feat1.dtype), p2.astype(feat2.dtype)

    # --- Row-tile selection ------------------------------------------------
    # Keep 2 inputs x 2 pipeline buffers x (TILE_N, D) f32 well under the
    # scoped-VMEM default of every generation (v7x has only 64 MiB physical),
    # cap at 1024 rows, round to a sublane multiple of 8.
    vmem_budget = 8 * 1024 * 1024                       # bytes for live input tiles
    bytes_per_row = D * 4 * 2 * 2                       # f32 x 2 inputs x 2 buffers
    tile_n = max(8, min(1024, vmem_budget // bytes_per_row))
    tile_n = (tile_n // 8) * 8
    tile_n = min(tile_n, ((N + 7) // 8) * 8)            # don't exceed (padded) N

    n_pad = pl.cdiv(N, tile_n) * tile_n
    if n_pad != N:
        pad = ((0, n_pad - N), (0, 0))
        feat1 = jnp.pad(feat1, pad)
        feat2 = jnp.pad(feat2, pad)

    grid = (n_pad // tile_n,)

    out = pl.pallas_call(
        _discriminator2_kernel,
        out_shape=jax.ShapeDtypeStruct((n_pad, 1), feat1.dtype),
        grid=grid,
        in_specs=[
            pl.BlockSpec((1, D), lambda i: (0, 0)),        # p1 (resident)
            pl.BlockSpec((1, D), lambda i: (0, 0)),        # p2 (resident)
            pl.BlockSpec((tile_n, D), lambda i: (i, 0)),   # feat1 row tile
            pl.BlockSpec((tile_n, D), lambda i: (i, 0)),   # feat2 row tile
        ],
        out_specs=pl.BlockSpec((tile_n, 1), lambda i: (i, 0)),
        compiler_params=pltpu.CompilerParams(
            dimension_semantics=("parallel",)),
    )(p1d.reshape(1, D), p2d.reshape(1, D), feat1, feat2)

    return out[:N]


if __name__ == "__main__":
    # Small shapes consistent with the module: ft_in=128, batch N=16.
    ft_in = 128
    N = 16

    # Parameters exactly as in __init__: torch.ones(ft_in)
    p1 = jnp.ones((ft_in,), dtype=jnp.float32)
    p2 = jnp.ones((ft_in,), dtype=jnp.float32)

    key = jax.random.PRNGKey(0)
    k_f1, k_f2, k_do = jax.random.split(key, 3)
    feat1 = jax.random.normal(k_f1, (N, ft_in), dtype=jnp.float32)
    feat2 = jax.random.normal(k_f2, (N, ft_in), dtype=jnp.float32)

    # Training mode (deterministic dropout key) — exercises full semantics.
    out = discriminator_2_forward(p1, p2, feat1, feat2,
                                  dropout=0.5, training=True, key=k_do)
    out = jax.block_until_ready(out)

    # Pure-JAX reference of the identical math (same dropout draws).
    keep = 0.5
    kk1, kk2 = jax.random.split(k_do)
    p1d = jnp.where(jax.random.bernoulli(kk1, keep, (ft_in,)), p1 / keep, 0.0)
    p2d = jnp.where(jax.random.bernoulli(kk2, keep, (ft_in,)), p2 / keep, 0.0)
    f1 = p1d * feat1
    f2 = p2d * feat2
    f1 = f1 / jnp.maximum(jnp.linalg.norm(f1, axis=1, keepdims=True), 1e-12)
    f2 = f2 / jnp.maximum(jnp.linalg.norm(f2, axis=1, keepdims=True), 1e-12)
    ref = jax.nn.sigmoid(jnp.diag(f1 @ f2.T)).reshape(-1, 1)

    assert out.shape == (N, 1)
    assert jnp.allclose(out, ref, atol=1e-5, rtol=1e-5)

    # Eval mode (no dropout) sanity check too.
    out_eval = jax.block_until_ready(
        discriminator_2_forward(p1, p2, feat1, feat2, training=False))
    f1e = feat1 / jnp.maximum(jnp.linalg.norm(feat1, axis=1, keepdims=True), 1e-12)
    f2e = feat2 / jnp.maximum(jnp.linalg.norm(feat2, axis=1, keepdims=True), 1e-12)
    ref_eval = jax.nn.sigmoid(jnp.sum(f1e * f2e, axis=1, keepdims=True))
    assert jnp.allclose(out_eval, ref_eval, atol=1e-5, rtol=1e-5)

    print("KERNEL_OK")
</pallas_src>

<mosaic_0001>
module attributes {stable_mosaic.version = 11 : i64} {
  func.func @_discriminator2_kernel(%arg0: i32, %arg1: memref<1x128xf32, #tpu.memory_space<vmem>>, %arg2: memref<1x128xf32, #tpu.memory_space<vmem>>, %arg3: memref<16x128xf32, #tpu.memory_space<vmem>>, %arg4: memref<16x128xf32, #tpu.memory_space<vmem>>, %arg5: memref<16x1xf32, #tpu.memory_space<vmem>>) attributes {dimension_semantics = [#tpu.dimension_semantics<parallel>], iteration_bounds = array<i64: 1>, scalar_prefetch = 0 : i64, scratch_operands = 0 : i64, tpu.core_type = #tpu.core_type<tc>, window_params = [{pipeline_mode = #tpu.pipeline_mode<synchronous>, transform_indices = @transform_0, window_bounds = array<i64: 1, 128>}, {pipeline_mode = #tpu.pipeline_mode<synchronous>, transform_indices = @transform_1, window_bounds = array<i64: 1, 128>}, {transform_indices = @transform_2, window_bounds = array<i64: 16, 128>}, {transform_indices = @transform_3, window_bounds = array<i64: 16, 128>}, {transform_indices = @transform_4, window_bounds = array<i64: 16, 1>}]} {
    %c0 = arith.constant 0 : index
    %c0_0 = arith.constant 0 : index
    %0 = vector.load %arg1[%c0, %c0_0] : memref<1x128xf32, #tpu.memory_space<vmem>>, vector<1x128xf32>
    %c0_1 = arith.constant 0 : index
    %c0_2 = arith.constant 0 : index
    %1 = vector.load %arg2[%c0_1, %c0_2] : memref<1x128xf32, #tpu.memory_space<vmem>>, vector<1x128xf32>
    %c0_3 = arith.constant 0 : index
    %c0_4 = arith.constant 0 : index
    %2 = vector.load %arg3[%c0_3, %c0_4] : memref<16x128xf32, #tpu.memory_space<vmem>>, vector<16x128xf32>
    %3 = vector.broadcast %0 : vector<1x128xf32> to vector<16x128xf32>
    %4 = arith.mulf %2, %3 : vector<16x128xf32>
    %c0_5 = arith.constant 0 : index
    %c0_6 = arith.constant 0 : index
    %5 = vector.load %arg4[%c0_5, %c0_6] : memref<16x128xf32, #tpu.memory_space<vmem>>, vector<16x128xf32>
    %6 = vector.broadcast %1 : vector<1x128xf32> to vector<16x128xf32>
    %7 = arith.mulf %5, %6 : vector<16x128xf32>
    %8 = arith.mulf %4, %4 : vector<16x128xf32>
    %cst = arith.constant dense<0.000000e+00> : vector<16xf32>
    %9 = vector.multi_reduction <add>, %8, %cst [1] : vector<16x128xf32> to vector<16xf32>
    %10 = vector.shape_cast %9 : vector<16xf32> to vector<16x1xf32>
    %11 = arith.mulf %7, %7 : vector<16x128xf32>
    %cst_7 = arith.constant dense<0.000000e+00> : vector<16xf32>
    %12 = vector.multi_reduction <add>, %11, %cst_7 [1] : vector<16x128xf32> to vector<16xf32>
    %13 = vector.shape_cast %12 : vector<16xf32> to vector<16x1xf32>
    %14 = arith.mulf %4, %7 : vector<16x128xf32>
    %cst_8 = arith.constant dense<0.000000e+00> : vector<16xf32>
    %15 = vector.multi_reduction <add>, %14, %cst_8 [1] : vector<16x128xf32> to vector<16xf32>
    %16 = vector.shape_cast %15 : vector<16xf32> to vector<16x1xf32>
    %cst_9 = arith.constant 1.000000e-24 : f32
    %17 = vector.broadcast %cst_9 : f32 to vector<16x1xf32>
    %18 = arith.maximumf %10, %17 : vector<16x1xf32>
    %19 = math.rsqrt %18 : vector<16x1xf32>
    %20 = arith.mulf %16, %19 : vector<16x1xf32>
    %cst_10 = arith.constant 1.000000e-24 : f32
    %21 = vector.broadcast %cst_10 : f32 to vector<16x1xf32>
    %22 = arith.maximumf %13, %21 : vector<16x1xf32>
    %23 = math.rsqrt %22 : vector<16x1xf32>
    %24 = arith.mulf %20, %23 : vector<16x1xf32>
    %25 = arith.negf %24 : vector<16x1xf32>
    %26 = math.exp %25 : vector<16x1xf32>
    %cst_11 = arith.constant 1.000000e+00 : f32
    %27 = vector.broadcast %cst_11 : f32 to vector<16x1xf32>
    %28 = arith.addf %27, %26 : vector<16x1xf32>
    %29 = arith.divf %27, %28 : vector<16x1xf32>
    %c0_12 = arith.constant 0 : index
    %c0_13 = arith.constant 0 : index
    %30 = vector.load %arg5[%c0_12, %c0_13] : memref<16x1xf32, #tpu.memory_space<vmem>>, vector<16x1xf32>
    tpu.vector_store %arg5[%c0_12, %c0_13], %29 {strides = array<i32>} : memref<16x1xf32, #tpu.memory_space<vmem>>, vector<16x1xf32>,
    return
  }
  func.func @transform_0(%arg0: i32) -> (i32, i32) {
    %c0_i32 = arith.constant 0 : i32
    %c0_i32_0 = arith.constant 0 : i32
    %c0_i32_1 = arith.constant 0 : i32
    return %c0_i32, %c0_i32_0 : i32, i32
  }
  func.func @transform_1(%arg0: i32) -> (i32, i32) {
    %c0_i32 = arith.constant 0 : i32
    %c0_i32_0 = arith.constant 0 : i32
    %c0_i32_1 = arith.constant 0 : i32
    return %c0_i32, %c0_i32_0 : i32, i32
  }
  func.func @transform_2(%arg0: i32) -> (i32, i32) {
    %c0_i32 = arith.constant 0 : i32
    %c0_i32_0 = arith.constant 0 : i32
    return %arg0, %c0_i32 : i32, i32
  }
  func.func @transform_3(%arg0: i32) -> (i32, i32) {
    %c0_i32 = arith.constant 0 : i32
    %c0_i32_0 = arith.constant 0 : i32
    return %arg0, %c0_i32 : i32, i32
  }
  func.func @transform_4(%arg0: i32) -> (i32, i32) {
    %c0_i32 = arith.constant 0 : i32
    %c0_i32_0 = arith.constant 0 : i32
    return %arg0, %c0_i32 : i32, i32
  }
}

</mosaic_0001>

<llo_original>
// kernel: tpu_custom_call.1
$region0: #{tpu_custom_call.1}
  #allocation0 [shape = 'u32[]', space=smem, size = 0x4, offset = 0x4, fixed_abs, tag = 'smem constant byte address 0x4 - core index']
  #allocation1 [shape = 'u32[144,128]{1,0:T(1,128)}', space=vmem, size = 0x12000, scoped, tag = 'internal scratch']
  %s0 = inlined_call_operand.hbm [shape: f32[1,128], index: 0, kind: input, shape index: {}]
  %s1 = inlined_call_operand.vmem [shape: f32[1,128], index: 1, kind: input, shape index: {}]
  %s2 = inlined_call_operand.hbm [shape: f32[16,128], index: 2, kind: input, shape index: {}]
  %s3 = inlined_call_operand.hbm [shape: f32[16,128], index: 3, kind: input, shape index: {}]
  %s4 = inlined_call_operand.vmem [shape: f32[16,1], index: 4, kind: output, shape index: {}]
  %s5 = sld [smem:[#allocation0]]
  $region38: #{tpu_custom_call.1} parent=0
    _
  %s7 = ssub.s32 1, %s5
  %s8 = scalar_select 0, %s7, %s5
  $region1: #{tpu_custom_call.1} parent=0
    #allocation2 [shape = 'u8[512]{0}', space=vmem, size = 0x400, scoped, tag = 'input window, operand 0, single buffered']
    #allocation3 [shape = 's32[1]{0}', space=sflag, size = 0x4, scoped, tag = 'scoped memory for tpu_custom_call.1']
    #allocation4 [shape = 'u8[8192]{0}', space=vmem, size = 0x2000, scoped, tag = 'input window, operand 2, single buffered']
    #allocation5 [shape = 's32[1]{0}', space=sflag, size = 0x4, scoped, tag = 'scoped memory for tpu_custom_call.1']
    #allocation6 [shape = 'u8[8192]{0}', space=vmem, size = 0x2000, scoped, tag = 'input window, operand 3, single buffered']
    %9 = vsyncpa [#allocation3], 0
    %10 = vsyncpa [#allocation5], 0
    // Predicated region
    $region2: #{tpu_custom_call.1} parent=1 // pred_check
      _
    $region3: #{tpu_custom_call.1} parent=1 // pred_check_branch
      %12 = sbr.rel (0) target = $region5
    $region4: #{tpu_custom_call.1} parent=1 // pred_region
      %s14 = ssub.s32 16, 16
      %15 = vsyncadd [#allocation3], %s14
      %s17 = sshll.u32 [#allocation2], 4
      %s18 = int_to_ptr.vmem [resolvable:$true] %s17
      %20 = dma.hbm_to_vmem [thread:$0]  %s0, 16, %s18, [#allocation3]
    $region5: #{tpu_custom_call.1} parent=1 // pred_fallthru
      _
    // Predicated region
    $region6: #{tpu_custom_call.1} parent=1 // pred_check
      _
    $region7: #{tpu_custom_call.1} parent=1 // pred_check_branch
      %22 = sbr.rel (0) target = $region9
    $region8: #{tpu_custom_call.1} parent=1 // pred_region
      _
    $region9: #{tpu_custom_call.1} parent=1 // pred_fallthru
      _
    // Predicated region
    $region10: #{tpu_custom_call.1} parent=1 // pred_check
      _
    $region11: #{tpu_custom_call.1} parent=1 // pred_check_branch
      %24 = sbr.rel (0) target = $region13
    $region12: #{tpu_custom_call.1} parent=1 // pred_region
      %s26 = ssub.s32 256, 256
      %27 = vsyncadd [#allocation5], %s26
      %s28 = sshll.u32 [#allocation4], 4
      %s29 = int_to_ptr.vmem [resolvable:$true] %s28
      %34 = dma.hbm_to_vmem [thread:$0]  %s2, 256, %s29, [#allocation5], 128, 128, 8
    $region13: #{tpu_custom_call.1} parent=1 // pred_fallthru
      _
    // Predicated region
    $region14: #{tpu_custom_call.1} parent=1 // pred_check
      _
    $region15: #{tpu_custom_call.1} parent=1 // pred_check_branch
      %36 = sbr.rel (0) target = $region17
    $region16: #{tpu_custom_call.1} parent=1 // pred_region
      %s38 = ssub.s32 256, 256
      %39 = vsyncadd [#allocation5], %s38
      %s40 = sshll.u32 [#allocation6], 4
      %s41 = int_to_ptr.vmem [resolvable:$true] %s40
      %46 = dma.hbm_to_vmem [thread:$0]  %s3, 256, %s41, [#allocation5], 128, 128, 8
    $region17: #{tpu_custom_call.1} parent=1 // pred_fallthru
      _
    // Predicated region
    $region18: #{tpu_custom_call.1} parent=1 // pred_check
      _
    $region19: #{tpu_custom_call.1} parent=1 // pred_check_branch
      %48 = sbr.rel (0) target = $region21
    $region20: #{tpu_custom_call.1} parent=1 // pred_region
      %49 = dma.done [#allocation3], 16
    $region21: #{tpu_custom_call.1} parent=1 // pred_fallthru
      _
    // Predicated region
    $region22: #{tpu_custom_call.1} parent=1 // pred_check
      _
    $region23: #{tpu_custom_call.1} parent=1 // pred_check_branch
      %51 = sbr.rel (0) target = $region25
    $region24: #{tpu_custom_call.1} parent=1 // pred_region
      %52 = dma.done [#allocation5], 256
    $region25: #{tpu_custom_call.1} parent=1 // pred_fallthru
      _
    // Predicated region
    $region26: #{tpu_custom_call.1} parent=1 // pred_check
      _
    $region27: #{tpu_custom_call.1} parent=1 // pred_check_branch
      %54 = sbr.rel (0) target = $region29
    $region28: #{tpu_custom_call.1} parent=1 // pred_region
      %55 = dma.done [#allocation5], 256
    $region29: #{tpu_custom_call.1} parent=1 // pred_fallthru
      _
    %v56 = vld [vmem:[#allocation2] sm:$0x1]
    %v57 = vld [vmem:[%s1] sm:$0x1]
    %v58 = vld [vmem:[#allocation4] sm:$0xff]
    %v59 = vld [vmem:[#allocation4 + $0x8] sm:$0xff]
    %v61 = vlaneseq
    %v62 = vshrl.u32 %v61, 7
    %v63 = vsub.s32 0, %v62
    %v64 = vrot.slane %v56, %v63
    %v66 = vmul.f32 %v58, %v64
    %v67 = vmul.f32 %v59, %v64
    %v68 = vld [vmem:[#allocation6] sm:$0xff]
    %v69 = vld [vmem:[#allocation6 + $0x8] sm:$0xff]
    %v71 = vlaneseq
    %v72 = vshrl.u32 %v71, 7
    %v73 = vsub.s32 0, %v72
    %v74 = vrot.slane %v57, %v73
    %v76 = vmul.f32 %v68, %v74
    %v77 = vmul.f32 %v69, %v74
    %v78 = vmul.f32 %v66, %v66
    %v79 = vmul.f32 %v67, %v67
    %80 = vadd.xlane.f32.xlu0 %v78
    %v81 = vpop.xlane.xlu0 %80
    %82 = vadd.xlane.f32.xlu0 %v79
    %v83 = vpop.xlane.xlu0 %82
    %v84 = vmul.f32 %v76, %v76
    %v85 = vmul.f32 %v77, %v77
    %86 = vadd.xlane.f32.xlu0 %v84
    %v87 = vpop.xlane.xlu0 %86
    %88 = vadd.xlane.f32.xlu0 %v85
    %v89 = vpop.xlane.xlu0 %88
    %v90 = vmul.f32 %v66, %v76
    %v91 = vmul.f32 %v67, %v77
    %92 = vadd.xlane.f32.xlu0 %v90
    %v93 = vpop.xlane.xlu0 %92
    %94 = vadd.xlane.f32.xlu0 %v91
    %v95 = vpop.xlane.xlu0 %94
    %v96 = vmax.f32 %v81, 1e-24
    %v97 = vmax.f32 %v83, 1e-24
    %v98 = vrsqrt.pop %v96
    %v99 = vrsqrt.pop %v97
    %v100 = vmul.f32 %v93, %v98
    %v101 = vmul.f32 %v95, %v99
    %v102 = vmax.f32 %v87, 1e-24
    %v103 = vmax.f32 %v89, 1e-24
    %v104 = vrsqrt.pop %v102
    %v105 = vrsqrt.pop %v103
    %v106 = vmul.f32 %v100, %v104
    %v107 = vmul.f32 %v101, %v105
    %v108 = vxor.u32 %v106, 2147483648
    %v109 = vxor.u32 %v107, 2147483648
    %v110 = vmul.f32 %v108, 1.442695
    %v111 = vpow.pop %v110
    %v112 = vmul.f32 %v109, 1.442695
    %v113 = vpow.pop %v112
    %v114 = vadd.f32 %v111, 1.0
    %v115 = vadd.f32 %v113, 1.0
    %v116 = vrcp.pop %v114
    %v117 = vmul.f32 1.0, %v116
    %v118 = vrcp.pop %v115
    %v119 = vmul.f32 1.0, %v118
    %vm120 = vcmask 7168
    %121 = vst.msk [vmem:[%s4] sm:$0xff] %vm120, %v117
    %122 = vst.msk [vmem:[%s4 + $0x8] sm:$0xff] %vm120, %v119
    // Predicated region
    $region30: #{tpu_custom_call.1} parent=1 // pred_check
      _
    $region31: #{tpu_custom_call.1} parent=1 // pred_check_branch
      %124 = sbr.rel (0) target = $region33
    $region32: #{tpu_custom_call.1} parent=1 // pred_region
      _
    $region33: #{tpu_custom_call.1} parent=1 // pred_fallthru
      _
    // Predicated region
    $region34: #{tpu_custom_call.1} parent=1 // pred_check
      _
    $region35: #{tpu_custom_call.1} parent=1 // pred_check_branch
      %126 = sbr.rel (0) target = $region37
    $region36: #{tpu_custom_call.1} parent=1 // pred_region
      _
    $region37: #{tpu_custom_call.1} parent=1 // pred_fallthru
      _
    %127 = vsyncpa [#allocation3], 1
    %128 = vsyncpa [#allocation5], 1

</llo_original>
